<compile_context>
chip_gen: v7x
topology: tpu7x:2x2x1
jax: 0.10.0
libtpu: 0.0.40
codegen_flags: <defaults>
</compile_context>

<pallas_src>
import jax
import jax.numpy as jnp
from jax.experimental import pallas as pl
from jax.experimental.pallas import tpu as pltpu

_LANE = 128


def _normalize_kernel(x_ref, o_ref):
    # Elementwise hot path on the VPU: (x - 0.5) * 2.  Weak-typed scalars keep
    # the compute in the input dtype (matches the PyTorch reference).
    o_ref[...] = (x_ref[...] - 0.5) * 2.0


def _normalize_2d(x2d: jax.Array) -> jax.Array:
    """Run the elementwise kernel over a (rows, 128) lane-dense slab."""
    nrows, ncols = x2d.shape
    itemsize = jnp.dtype(x2d.dtype).itemsize
    # Sub-32-bit dtypes pack along sublanes: min sublane tile is 8 (f32),
    # 16 (bf16/f16), 32 (int8/fp8).
    sublane = max(8, 32 // itemsize)

    # Target ~2 MiB blocks.  Input + output, double-buffered, is ~8 MiB live
    # VMEM: comfortably inside every generation's scoped VMEM budget
    # (incl. v7x's 64 MiB physical / 32 MiB default-scoped), so no
    # vmem_limit_bytes override is needed.
    max_tile_rows = (2 * 1024 * 1024) // (ncols * itemsize)
    # Keep at least ~8 grid steps when the tensor is large enough, so the
    # "parallel" grid axis can be sharded across v7x's two TensorCores, but
    # never shrink a block below ~256 KiB (per-step overhead would dominate).
    min_tile_rows = max(sublane, (256 * 1024) // (ncols * itemsize))
    target = pl.cdiv(nrows, 8)
    tile_rows = max(min_tile_rows, min(max_tile_rows, target))
    # Round up to the packed-sublane multiple.
    tile_rows = ((tile_rows + sublane - 1) // sublane) * sublane
    if tile_rows >= nrows:
        # Single block covering the whole array (full-dim block shapes are
        # always legal, even when not (8,128)-aligned).
        tile_rows = nrows

    grid = (pl.cdiv(nrows, tile_rows),)  # partial last block is masked

    return pl.pallas_call(
        _normalize_kernel,
        out_shape=jax.ShapeDtypeStruct((nrows, ncols), x2d.dtype),
        grid=grid,
        in_specs=[pl.BlockSpec((tile_rows, ncols), lambda i: (i, 0))],
        out_specs=pl.BlockSpec((tile_rows, ncols), lambda i: (i, 0)),
        compiler_params=pltpu.CompilerParams(
            dimension_semantics=("parallel",)
        ),
    )(x2d)


def normalize(image: jax.Array) -> jax.Array:
    """Pallas equivalent of Normalize.forward: (image - 0.5) * 2."""
    orig_shape = image.shape
    n = image.size
    if n == 0:
        return image

    if n % _LANE == 0:
        # Fast path (typical NCHW images): metadata-only reshapes, zero extra
        # HBM passes around the kernel.
        x2d = image.reshape(n // _LANE, _LANE)
        return _normalize_2d(x2d).reshape(orig_shape)

    # General path: pad the flat array up to a multiple of 128 lanes.  This
    # costs one extra pass over the tensor each way; uncommon for image input.
    # TODO(synk): handle the ragged tail with an in-kernel masked edge block to
    # make this path zero-copy as well.
    pad = _LANE - (n % _LANE)
    flat = image.reshape(-1)
    padded = jnp.pad(flat, (0, pad))
    out = _normalize_2d(padded.reshape(-1, _LANE))
    return out.reshape(-1)[:n].reshape(orig_shape)


if __name__ == "__main__":
    key = jax.random.PRNGKey(0)
    normalize_jit = jax.jit(normalize)

    # NCHW image, small shapes: batch=2, channels=4, H=W=16 (fast path).
    x = jax.random.uniform(key, (2, 4, 16, 16), dtype=jnp.float32)
    y = normalize_jit(x)
    jax.block_until_ready(y)
    y_ref = (x - 0.5) * 2.0
    assert y.shape == x.shape and y.dtype == x.dtype
    assert jnp.allclose(y, y_ref, atol=1e-6), "mismatch vs reference (fast path)"

    # Odd element count exercises the padded general path.
    x2 = jax.random.uniform(jax.random.PRNGKey(1), (3, 5, 7), dtype=jnp.float32)
    y2 = normalize_jit(x2)
    jax.block_until_ready(y2)
    y2_ref = (x2 - 0.5) * 2.0
    assert y2.shape == x2.shape and y2.dtype == x2.dtype
    assert jnp.allclose(y2, y2_ref, atol=1e-6), "mismatch vs reference (general path)"

    print("KERNEL_OK")
</pallas_src>

<mosaic_0001>
module attributes {stable_mosaic.version = 11 : i64} {
  func.func @_normalize_kernel(%arg0: i32, %arg1: memref<16x128xf32, #tpu.memory_space<vmem>>, %arg2: memref<16x128xf32, #tpu.memory_space<vmem>>) attributes {dimension_semantics = [#tpu.dimension_semantics<parallel>], iteration_bounds = array<i64: 1>, scalar_prefetch = 0 : i64, scratch_operands = 0 : i64, tpu.core_type = #tpu.core_type<tc>, window_params = [{transform_indices = @transform_0, window_bounds = array<i64: 16, 128>}, {transform_indices = @transform_1, window_bounds = array<i64: 16, 128>}]} {
    %c0 = arith.constant 0 : index
    %c0_0 = arith.constant 0 : index
    %0 = vector.load %arg1[%c0, %c0_0] : memref<16x128xf32, #tpu.memory_space<vmem>>, vector<16x128xf32>
    %cst = arith.constant 5.000000e-01 : f32
    %1 = vector.broadcast %cst : f32 to vector<16x128xf32>
    %2 = arith.subf %0, %1 : vector<16x128xf32>
    %cst_1 = arith.constant 2.000000e+00 : f32
    %3 = vector.broadcast %cst_1 : f32 to vector<16x128xf32>
    %4 = arith.mulf %2, %3 : vector<16x128xf32>
    %c0_2 = arith.constant 0 : index
    %c0_3 = arith.constant 0 : index
    %5 = vector.load %arg2[%c0_2, %c0_3] : memref<16x128xf32, #tpu.memory_space<vmem>>, vector<16x128xf32>
    tpu.vector_store %arg2[%c0_2, %c0_3], %4 {strides = array<i32>} : memref<16x128xf32, #tpu.memory_space<vmem>>, vector<16x128xf32>,
    return
  }
  func.func @transform_0(%arg0: i32) -> (i32, i32) {
    %c0_i32 = arith.constant 0 : i32
    %c0_i32_0 = arith.constant 0 : i32
    return %arg0, %c0_i32 : i32, i32
  }
  func.func @transform_1(%arg0: i32) -> (i32, i32) {
    %c0_i32 = arith.constant 0 : i32
    %c0_i32_0 = arith.constant 0 : i32
    return %arg0, %c0_i32 : i32, i32
  }
}

</mosaic_0001>

<llo_original>
// kernel: normalize.1
$region0: #{normalize.1}
  #allocation0 [shape = 'u32[]', space=smem, size = 0x4, offset = 0x4, fixed_abs, tag = 'smem constant byte address 0x4 - core index']
  #allocation1 [shape = 'u32[144,128]{1,0:T(1,128)}', space=vmem, size = 0x12000, scoped, tag = 'internal scratch']
  %s0 = inlined_call_operand.vmem [shape: f32[16,128], index: 0, kind: input, shape index: {}]
  %s1 = inlined_call_operand.vmem [shape: f32[16,128], index: 1, kind: output, shape index: {}]
  %s2 = sld [smem:[#allocation0]]
  $region14: #{normalize.1} parent=0
    _
  %s4 = ssub.s32 1, %s2
  %s5 = scalar_select 0, %s4, %s2
  // Predicated region
  $region2: #{normalize.1} parent=0 // pred_check
    _
  $region3: #{normalize.1} parent=0 // pred_check_branch
    %7 = sbr.rel (0) target = $region5
  $region4: #{normalize.1} parent=0 // pred_region
    _
  $region5: #{normalize.1} parent=0 // pred_fallthru
    _
  %v8 = vld [vmem:[%s0] sm:$0xff]
  %v9 = vld [vmem:[%s0 + $0x8] sm:$0xff]
  %v10 = vsub.f32 %v8, 0.5
  %v11 = vsub.f32 %v9, 0.5
  %v12 = vmul.f32 %v10, 2.0
  %v13 = vmul.f32 %v11, 2.0
  %14 = vst [vmem:[%s1] sm:$0xff] %v12
  %15 = vst [vmem:[%s1 + $0x8] sm:$0xff] %v13
  // Predicated region
  $region6: #{normalize.1} parent=0 // pred_check
    _
  $region7: #{normalize.1} parent=0 // pred_check_branch
    %17 = sbr.rel (0) target = $region9
  $region8: #{normalize.1} parent=0 // pred_region
    _
  $region9: #{normalize.1} parent=0 // pred_fallthru
    _
  // Predicated region
  $region10: #{normalize.1} parent=0 // pred_check
    _
  $region11: #{normalize.1} parent=0 // pred_check_branch
    %19 = sbr.rel (0) target = $region13
  $region12: #{normalize.1} parent=0 // pred_region
    _
  $region13: #{normalize.1} parent=0 // pred_fallthru
    _

</llo_original>
